<compile_context>
chip_gen: v7x
topology: tpu7x:2x2x1
jax: 0.10.0
libtpu: 0.0.40
codegen_flags: <defaults>
</compile_context>

<pallas_src>
import functools

import jax
import jax.numpy as jnp
from jax.experimental import pallas as pl
from jax.experimental.pallas import tpu as pltpu

_HIDDEN = 128


def _round_up(x, m):
    return (x + m - 1) // m * m


def _vmem_budgets():
    """(vmem_capacity, max x-slab bytes per block, vmem_limit cap) per generation."""
    cap = 64 << 20  # conservative default (v7x-sized)
    try:
        info = pltpu.get_tpu_info()
        cap = int(getattr(info, "vmem_capacity_bytes", cap))
    except Exception:
        pass
    if cap >= (96 << 20):            # v5e / v6e: 128 MiB VMEM per core
        return cap, 8 << 20, 100 << 20
    return cap, 4 << 20, 48 << 20    # v7x: 64 MiB VMEM per core


def _mlp_kernel_resident(x_ref, w1_ref, b1_ref, w2_ref, b2_ref, o_ref, *, precision):
    # fc1: (tb, D) @ (D, 128) on the MXU with f32 accumulation.
    h = jnp.dot(x_ref[...], w1_ref[...],
                preferred_element_type=jnp.float32, precision=precision)
    h = jnp.maximum(h + b1_ref[...], 0.0)                     # bias + ReLU (f32)
    # fc2 (128 -> 1): VPU multiply + lane reduce; b2 scalar from SMEM.
    z = jnp.sum(h * w2_ref[...], axis=-1) + b2_ref[0, 0]      # (tb,)
    # Lane-dense store (batch on the lane axis).  Output traffic is negligible
    # either way; only revisit if a bundle dump shows the relayout on the
    # critical path for small D.
    o_ref[...] = jax.nn.sigmoid(z).reshape(1, -1).astype(o_ref.dtype)


def _mlp_kernel_ktiled(x_ref, w1_ref, b1_ref, w2_ref, b2_ref, o_ref, acc_ref,
                       *, precision):
    # Streams x as (tb, tk) and w1 as (tk, H); f32 accumulator lives in VMEM.
    k = pl.program_id(1)

    @pl.when(k == 0)
    def _():
        acc_ref[...] = jnp.zeros_like(acc_ref)

    acc_ref[...] += jnp.dot(x_ref[...], w1_ref[...],
                            preferred_element_type=jnp.float32,
                            precision=precision)

    @pl.when(k == pl.num_programs(1) - 1)
    def _():
        h = jnp.maximum(acc_ref[...] + b1_ref[...], 0.0)
        z = jnp.sum(h * w2_ref[...], axis=-1) + b2_ref[0, 0]
        o_ref[...] = jax.nn.sigmoid(z).reshape(1, -1).astype(o_ref.dtype)


def simple_nn_forward(x, w1, b1, w2, b2, *, block_b=None, block_k=None,
                      precision=None, min_pallas_elems=16384):
    """sigmoid(relu(x @ w1 + b1) @ w2 + b2).

    x : (B, D); w1: (D, 128); b1: (1, 128); w2: (128, 1); b2: (1, 1).
    Weights are already stored in (in, out) layout (PyTorch weight transposed).
    Compute dtype follows x.dtype (pass bf16 x for bf16 HBM traffic).
    """
    B, D = x.shape
    H = w1.shape[1]

    # Tiny problems: Pallas launch + ~0.35us/step overhead dominates; let XLA fuse.
    if B < 128 or B * D < min_pallas_elems:
        h = jnp.maximum(jnp.dot(x, w1, precision=precision) + b1, 0.0)
        return jax.nn.sigmoid(h @ w2 + b2).astype(x.dtype)

    cdt = x.dtype                       # no wrapper-side cast of x
    itemsize = jnp.dtype(cdt).itemsize
    w1c = w1.astype(cdt)                # tiny, reusable -> casting here is fine
    b1r = b1.reshape(1, H).astype(jnp.float32)
    w2r = w2.reshape(1, H).astype(jnp.float32)   # (128, 1) -> (1, 128) row
    b2s = b2.reshape(1, 1).astype(jnp.float32)   # scalar, lives in SMEM

    vmem_cap, max_x_slab, vmem_limit_cap = _vmem_budgets()

    # --- Decide K (input_size) tiling: only when w1 cannot stay resident. -----
    tk = D
    if block_k is not None:
        bk = _round_up(int(block_k), 128)
        if bk < D and D % bk == 0:
            tk = bk
    elif 2 * D * H * itemsize > vmem_cap // 4 and D % 128 == 0:
        tk = next(c for c in (1024, 768, 512, 384, 256, 128) if D % c == 0)
    k_tiled = tk != D
    # TODO(synk): very large D that is not a multiple of 128 still uses the
    # resident-w1 path (streaming it needs a masked edge K-block).

    # --- Batch tile: B-aware, >= ~4 grid steps, fits the per-block slab budget.
    tb = 2048
    while tb > 128 and tb * min(D, tk) * itemsize > max_x_slab:
        tb //= 2
    tb = max(128, min(tb, _round_up(pl.cdiv(B, 4), 128), _round_up(B, 128)))
    if block_b is not None:
        tb = max(128, _round_up(int(block_b), 128))  # validate user tile (sublane/lane)
    grid_b = pl.cdiv(B, tb)   # ragged edge block is masked by Pallas (no jnp.pad)

    # --- VMEM accounting (Pallas double-buffers every BlockSpec, even constant).
    if k_tiled:
        vmem_bytes = (2 * tb * tk * itemsize       # x blocks (double-buffered)
                      + 2 * tk * H * itemsize      # w1 blocks (double-buffered)
                      + 2 * tb * 4                 # output rows
                      + 2 * 2 * H * 4              # b1, w2 rows (counted 2x)
                      + 2 * tb * H * 4)            # f32 accumulator + epilogue temp
    else:
        vmem_bytes = (2 * tb * D * itemsize        # x blocks (double-buffered)
                      + 2 * tb * 4                 # output rows
                      + 2 * (D * H * itemsize + 2 * H * 4)  # residents counted 2x
                      + tb * H * 4)                # fc1 activation temp
    vmem_limit = int(min(max(2 * vmem_bytes, 16 << 20), vmem_limit_cap))

    if k_tiled:
        kernel = functools.partial(_mlp_kernel_ktiled, precision=precision)
        out_row = pl.pallas_call(
            kernel,
            out_shape=jax.ShapeDtypeStruct((1, B), jnp.float32),
            grid=(grid_b, D // tk),
            in_specs=[
                pl.BlockSpec((tb, tk), lambda i, k: (i, k)),          # x streamed
                pl.BlockSpec((tk, H), lambda i, k: (k, 0)),           # w1 streamed
                pl.BlockSpec((1, H), lambda i, k: (0, 0)),            # b1 resident
                pl.BlockSpec((1, H), lambda i, k: (0, 0)),            # w2 row resident
                pl.BlockSpec(memory_space=pltpu.MemorySpace.SMEM),    # b2 scalar
            ],
            out_specs=pl.BlockSpec((1, tb), lambda i, k: (0, i)),     # lane-dense
            scratch_shapes=[pltpu.VMEM((tb, H), jnp.float32)],        # accumulator
            compiler_params=pltpu.CompilerParams(
                dimension_semantics=("parallel", "arbitrary"),
                vmem_limit_bytes=vmem_limit),
        )(x, w1c, b1r, w2r, b2s)
    else:
        kernel = functools.partial(_mlp_kernel_resident, precision=precision)
        out_row = pl.pallas_call(
            kernel,
            out_shape=jax.ShapeDtypeStruct((1, B), jnp.float32),
            grid=(grid_b,),
            in_specs=[
                pl.BlockSpec((tb, D), lambda i: (i, 0)),              # x batch-tiled
                pl.BlockSpec((D, H), lambda i: (0, 0)),               # w1 resident
                pl.BlockSpec((1, H), lambda i: (0, 0)),               # b1 resident
                pl.BlockSpec((1, H), lambda i: (0, 0)),               # w2 row resident
                pl.BlockSpec(memory_space=pltpu.MemorySpace.SMEM),    # b2 scalar
            ],
            out_specs=pl.BlockSpec((1, tb), lambda i: (0, i)),        # lane-dense
            compiler_params=pltpu.CompilerParams(
                dimension_semantics=("parallel",),
                vmem_limit_bytes=vmem_limit),
        )(x, w1c, b1r, w2r, b2s)

    return out_row[0, :].reshape(B, 1).astype(x.dtype)


def init_params(key, input_size, hidden=_HIDDEN):
    # nn.Linear default init: U(-1/sqrt(fan_in), 1/sqrt(fan_in)), (in, out) layout.
    k1, k2, k3, k4 = jax.random.split(key, 4)
    bound1 = 1.0 / jnp.sqrt(jnp.float32(input_size))
    bound2 = 1.0 / jnp.sqrt(jnp.float32(hidden))
    w1 = jax.random.uniform(k1, (input_size, hidden), jnp.float32, -bound1, bound1)
    b1 = jax.random.uniform(k2, (1, hidden), jnp.float32, -bound1, bound1)
    w2 = jax.random.uniform(k3, (hidden, 1), jnp.float32, -bound2, bound2)
    b2 = jax.random.uniform(k4, (1, 1), jnp.float32, -bound2, bound2)
    return w1, b1, w2, b2


if __name__ == "__main__":
    key = jax.random.PRNGKey(0)
    kx1, kx2, kx3, kp = jax.random.split(key, 4)

    def ref_fn(x, w1, b1, w2, b2):
        xf = x.astype(jnp.float32)
        w1f = w1.astype(jnp.float32)
        return jax.nn.sigmoid(jnp.maximum(xf @ w1f + b1, 0.0) @ w2 + b2)

    # 1) f32, full-D resident path: B=384, D=96 -> tb=128, 3-step pipelined grid.
    B1, D1 = 384, 96
    w1, b1, w2, b2 = init_params(kp, D1)
    x1 = jax.random.normal(kx1, (B1, D1), jnp.float32)
    out1 = jax.block_until_ready(simple_nn_forward(x1, w1, b1, w2, b2))
    assert out1.shape == (B1, 1)
    assert jnp.allclose(out1, ref_fn(x1, w1, b1, w2, b2), atol=1e-5, rtol=1e-5)

    # 2) Ragged batch: B=200 -> no wrapper jnp.pad, Pallas masks the edge block.
    B2, D2 = 200, 128
    w1b, b1b, w2b, b2b = init_params(kp, D2)
    x2 = jax.random.normal(kx2, (B2, D2), jnp.float32)
    out2 = jax.block_until_ready(simple_nn_forward(x2, w1b, b1b, w2b, b2b))
    assert out2.shape == (B2, 1)
    assert jnp.allclose(out2, ref_fn(x2, w1b, b1b, w2b, b2b), atol=1e-5, rtol=1e-5)

    # 3) bf16-at-source x (no wrapper cast of x; only tiny w1 is cast).
    B3 = 256
    x3 = jax.random.normal(kx3, (B3, D2), jnp.float32).astype(jnp.bfloat16)
    out3 = jax.block_until_ready(simple_nn_forward(x3, w1b, b1b, w2b, b2b))
    assert out3.shape == (B3, 1)
    ref3 = ref_fn(x3, w1b.astype(jnp.bfloat16), b1b, w2b, b2b)
    assert jnp.allclose(out3.astype(jnp.float32), ref3, atol=2e-2, rtol=2e-2)

    # 4) K-tiled path: streams x/w1 over input_size with an f32 VMEM accumulator.
    B4, D4 = 256, 256
    w1c, b1c, w2c, b2c = init_params(kp, D4)
    x4 = jax.random.normal(kx1, (B4, D4), jnp.float32)
    out4 = jax.block_until_ready(
        simple_nn_forward(x4, w1c, b1c, w2c, b2c, block_k=128))
    assert out4.shape == (B4, 1)
    assert jnp.allclose(out4, ref_fn(x4, w1c, b1c, w2c, b2c), atol=5e-3, rtol=5e-3)

    print("KERNEL_OK")
</pallas_src>

<mosaic_0001>
module attributes {stable_mosaic.version = 11 : i64} {
  func.func @_mlp_kernel_resident(%arg0: i32, %arg1: memref<128x96xf32, #tpu.memory_space<vmem>>, %arg2: memref<96x128xf32, #tpu.memory_space<vmem>>, %arg3: memref<1x128xf32, #tpu.memory_space<vmem>>, %arg4: memref<1x128xf32, #tpu.memory_space<vmem>>, %arg5: memref<1x1xf32, #tpu.memory_space<smem>>, %arg6: memref<1x128xf32, #tpu.memory_space<vmem>>) attributes {dimension_semantics = [#tpu.dimension_semantics<parallel>], iteration_bounds = array<i64: 3>, scalar_prefetch = 0 : i64, scratch_operands = 0 : i64, tpu.core_type = #tpu.core_type<tc>, window_params = [{transform_indices = @transform_0, window_bounds = array<i64: 128, 96>}, {pipeline_mode = #tpu.pipeline_mode<synchronous>, transform_indices = @transform_1, window_bounds = array<i64: 96, 128>}, {pipeline_mode = #tpu.pipeline_mode<synchronous>, transform_indices = @transform_2, window_bounds = array<i64: 1, 128>}, {pipeline_mode = #tpu.pipeline_mode<synchronous>, transform_indices = @transform_3, window_bounds = array<i64: 1, 128>}, {transform_indices = @transform_4, window_bounds = array<i64: 1, 1>}, {transform_indices = @transform_5, window_bounds = array<i64: 1, 128>}]} {
    %c0 = arith.constant 0 : index
    %c0_0 = arith.constant 0 : index
    %0 = vector.load %arg1[%c0, %c0_0] : memref<128x96xf32, #tpu.memory_space<vmem>>, vector<128x96xf32>
    %c0_1 = arith.constant 0 : index
    %c0_2 = arith.constant 0 : index
    %1 = vector.load %arg2[%c0_1, %c0_2] : memref<96x128xf32, #tpu.memory_space<vmem>>, vector<96x128xf32>
    %cst = arith.constant dense<0.000000e+00> : vector<128x128xf32>
    %2 = tpu.matmul %0, %1, %cst {dimension_numbers = #tpu.dot_dimension_numbers<[1], [0], [0], [1], [0, 0, 1, 1], [], []>} : vector<128x96xf32>, vector<96x128xf32>, vector<128x128xf32> -> vector<128x128xf32>
    %c0_3 = arith.constant 0 : index
    %c0_4 = arith.constant 0 : index
    %3 = vector.load %arg3[%c0_3, %c0_4] : memref<1x128xf32, #tpu.memory_space<vmem>>, vector<1x128xf32>
    %4 = vector.broadcast %3 : vector<1x128xf32> to vector<128x128xf32>
    %5 = arith.addf %2, %4 : vector<128x128xf32>
    %cst_5 = arith.constant 0.000000e+00 : f32
    %6 = vector.broadcast %cst_5 : f32 to vector<128x128xf32>
    %7 = arith.maximumf %5, %6 : vector<128x128xf32>
    %c0_6 = arith.constant 0 : index
    %c0_7 = arith.constant 0 : index
    %8 = vector.load %arg4[%c0_6, %c0_7] : memref<1x128xf32, #tpu.memory_space<vmem>>, vector<1x128xf32>
    %9 = vector.broadcast %8 : vector<1x128xf32> to vector<128x128xf32>
    %10 = arith.mulf %7, %9 : vector<128x128xf32>
    %cst_8 = arith.constant dense<0.000000e+00> : vector<128xf32>
    %11 = vector.multi_reduction <add>, %10, %cst_8 [1] : vector<128x128xf32> to vector<128xf32>
    %c0_9 = arith.constant 0 : index
    %c0_10 = arith.constant 0 : index
    %12 = memref.load %arg5[%c0_9, %c0_10] : memref<1x1xf32, #tpu.memory_space<smem>>
    %13 = vector.broadcast %12 : f32 to vector<128xf32>
    %14 = arith.addf %11, %13 : vector<128xf32>
    %15 = arith.negf %14 : vector<128xf32>
    %16 = math.exp %15 : vector<128xf32>
    %cst_11 = arith.constant 1.000000e+00 : f32
    %17 = vector.broadcast %cst_11 : f32 to vector<128xf32>
    %18 = arith.addf %17, %16 : vector<128xf32>
    %19 = arith.divf %17, %18 : vector<128xf32>
    %20 = vector.shape_cast %19 : vector<128xf32> to vector<1x128xf32>
    %c0_12 = arith.constant 0 : index
    %c0_13 = arith.constant 0 : index
    %21 = vector.load %arg6[%c0_12, %c0_13] : memref<1x128xf32, #tpu.memory_space<vmem>>, vector<1x128xf32>
    tpu.vector_store %arg6[%c0_12, %c0_13], %20 {strides = array<i32>} : memref<1x128xf32, #tpu.memory_space<vmem>>, vector<1x128xf32>,
    return
  }
  func.func @transform_0(%arg0: i32) -> (i32, i32) {
    %c0_i32 = arith.constant 0 : i32
    %c0_i32_0 = arith.constant 0 : i32
    return %arg0, %c0_i32 : i32, i32
  }
  func.func @transform_1(%arg0: i32) -> (i32, i32) {
    %c0_i32 = arith.constant 0 : i32
    %c0_i32_0 = arith.constant 0 : i32
    %c0_i32_1 = arith.constant 0 : i32
    return %c0_i32, %c0_i32_0 : i32, i32
  }
  func.func @transform_2(%arg0: i32) -> (i32, i32) {
    %c0_i32 = arith.constant 0 : i32
    %c0_i32_0 = arith.constant 0 : i32
    %c0_i32_1 = arith.constant 0 : i32
    return %c0_i32, %c0_i32_0 : i32, i32
  }
  func.func @transform_3(%arg0: i32) -> (i32, i32) {
    %c0_i32 = arith.constant 0 : i32
    %c0_i32_0 = arith.constant 0 : i32
    %c0_i32_1 = arith.constant 0 : i32
    return %c0_i32, %c0_i32_0 : i32, i32
  }
  func.func @transform_4(%arg0: i32) -> (i32, i32) {
    %c0_i32 = arith.constant 0 : i32
    %c0_i32_0 = arith.constant 0 : i32
    %c0_i32_1 = arith.constant 0 : i32
    return %c0_i32, %c0_i32_0 : i32, i32
  }
  func.func @transform_5(%arg0: i32) -> (i32, i32) {
    %c0_i32 = arith.constant 0 : i32
    %c0_i32_0 = arith.constant 0 : i32
    return %c0_i32, %arg0 : i32, i32
  }
}

</mosaic_0001>

<llo_original>
// kernel: tpu_custom_call.1
$region0: #{tpu_custom_call.1}
  #allocation0 [shape = 'u32[]', space=smem, size = 0x4, offset = 0x4, fixed_abs, tag = 'smem constant byte address 0x4 - core index']
  #allocation1 [shape = 'u32[144,128]{1,0:T(1,128)}', space=vmem, size = 0x12000, scoped, tag = 'internal scratch']
  #allocation2 [shape = 'f32[1,1]{1,0:T(1,128)S(6)}', space=smem, size = 0x200, scoped, tag = 'scoped memory for tpu_custom_call.1']
  %s0 = inlined_call_operand.vmem [shape: f32[384,96], index: 0, kind: input, shape index: {}]
  %s1 = inlined_call_operand.vmem [shape: f32[96,128], index: 1, kind: input, shape index: {}]
  %s2 = inlined_call_operand.vmem [shape: f32[1,128], index: 2, kind: input, shape index: {}]
  %s3 = inlined_call_operand.vmem [shape: f32[1,128], index: 3, kind: input, shape index: {}]
  %s4 = inlined_call_operand.<no memory space> [shape: f32[1,1], index: 4, kind: input, shape index: {}]
  %s5 = inlined_call_operand.hbm [shape: f32[1,384], index: 5, kind: output, shape index: {}]
  %s6 = sld [smem:[#allocation0]]
  $region53: #{tpu_custom_call.1} parent=0
    _
  %s8 = ssub.s32 1, %s6
  %s9 = scalar_select 0, %s8, %s6
  %10 = sst [smem:[#allocation2]] %s4
  $region1: #{tpu_custom_call.1} parent=0
    #allocation3 [shape = 'u8[1024]{0}', space=vmem, size = 0x400, scoped, tag = 'output window, operand 0']
    #allocation4 [shape = 's32[2]{0}', space=sflag, size = 0x8, scoped, tag = 'scoped memory for tpu_custom_call.1']
    %11 = vsyncpa [#allocation4], 0
    %s12 = scalar_lea.sflag [#allocation4], 1
    %13 = vsyncpa %s12, 0
    loop: start=0, step=1, limit=5
    $region2: #{tpu_custom_call.1} parent=1 // loop_pre_header
      _
    $region3: #{tpu_custom_call.1} parent=1 // loop_header
      %s15 = sphi 0, %s19
      %p16 = scmp.ge.s32.totalorder %s15, 5
      %s25 = sphi 0, %s27
      %s28 = sphi 0, %s25
      %s29 = sphi 0, %s28
      %s45 = sphi 0, %s29
      %s49 = sphi 0, %s49
      %s51 = sphi 0, %s49
      %s52 = sphi 0, %s51
      %s66 = sphi 0, %s52
      %s70 = sphi 0, %s70
      %s72 = sphi 0, %s70
      %s73 = sphi 0, %s72
      %s87 = sphi 0, %s73
      %s91 = sphi 0, %s91
      %s93 = sphi 0, %s91
      %s94 = sphi 0, %s93
      %s108 = sphi 0, %s94
      %s112 = sphi 0, %s112
      %s114 = sphi 0, %s112
      %s115 = sphi 0, %s114
      %s129 = sphi 0, %s115
      %s135 = sphi 0, %s137
      %s138 = sphi 0, %s135
      %s139 = sphi 0, %s138
      %s155 = sphi 0, %s139
    $region4: #{tpu_custom_call.1} parent=1 // loop_header_branch
      %18 = sbr.rel (%p16) target = $region8
    $region5: #{tpu_custom_call.1} parent=1 // loop_body
      %s20 = ssub.s32 %s15, 1
      %s21 = ssub.s32 %s15, 2
      %s22 = sadd.s32 %s15, 1
      %s23 = ssub.s32 %s15, %s22
      %p24 = scmp.eq.s32.totalorder %s23, 0
      %s26 = sadd.s32 %s25, 1
      %s27 = scalar_select %p24, %s25, %s26
      %p30 = pneg %p24
      %p31 = scmp.eq.s32.totalorder %s15, 2
      %p32 = por %p30, %p31
      %p33 = scmp.ne.s32.totalorder %s25, %s28
      %p34 = scmp.eq.s32.totalorder %s15, 0
      %p35 = por %p33, %p34
      %p36 = scmp.ne.s32.totalorder %s25, %s28
      %p37 = scmp.eq.s32.totalorder %s20, 2
      %p38 = por %p36, %p37
      %p39 = scmp.ne.s32.totalorder %s28, %s29
      %p40 = scmp.eq.s32.totalorder %s20, 0
      %p41 = por %p39, %p40
      %p42 = scmp.ne.s32.totalorder %s28, %s29
      %p43 = scmp.eq.s32.totalorder %s21, 2
      %p44 = por %p42, %p43
      %p46 = scmp.ne.s32.totalorder %s29, %s45
      %p47 = scmp.eq.s32.totalorder %s21, 0
      %p48 = por %p46, %p47
      %s50 = sadd.s32 %s49, 1
      %p53 = scmp.eq.s32.totalorder %s15, 2
      %p54 = scmp.ne.s32.totalorder %s49, %s51
      %p55 = scmp.eq.s32.totalorder %s15, 0
      %p56 = por %p54, %p55
      %p57 = scmp.ne.s32.totalorder %s49, %s51
      %p58 = scmp.eq.s32.totalorder %s20, 2
      %p59 = por %p57, %p58
      %p60 = scmp.ne.s32.totalorder %s51, %s52
      %p61 = scmp.eq.s32.totalorder %s20, 0
      %p62 = por %p60, %p61
      %p63 = scmp.ne.s32.totalorder %s51, %s52
      %p64 = scmp.eq.s32.totalorder %s21, 2
      %p65 = por %p63, %p64
      %p67 = scmp.ne.s32.totalorder %s52, %s66
      %p68 = scmp.eq.s32.totalorder %s21, 0
      %p69 = por %p67, %p68
      %s71 = sadd.s32 %s70, 1
      %p74 = scmp.eq.s32.totalorder %s15, 2
      %p75 = scmp.ne.s32.totalorder %s70, %s72
      %p76 = scmp.eq.s32.totalorder %s15, 0
      %p77 = por %p75, %p76
      %p78 = scmp.ne.s32.totalorder %s70, %s72
      %p79 = scmp.eq.s32.totalorder %s20, 2
      %p80 = por %p78, %p79
      %p81 = scmp.ne.s32.totalorder %s72, %s73
      %p82 = scmp.eq.s32.totalorder %s20, 0
      %p83 = por %p81, %p82
      %p84 = scmp.ne.s32.totalorder %s72, %s73
      %p85 = scmp.eq.s32.totalorder %s21, 2
      %p86 = por %p84, %p85
      %p88 = scmp.ne.s32.totalorder %s73, %s87
      %p89 = scmp.eq.s32.totalorder %s21, 0
      %p90 = por %p88, %p89
      %s92 = sadd.s32 %s91, 1
      %p95 = scmp.eq.s32.totalorder %s15, 2
      %p96 = scmp.ne.s32.totalorder %s91, %s93
      %p97 = scmp.eq.s32.totalorder %s15, 0
      %p98 = por %p96, %p97
      %p99 = scmp.ne.s32.totalorder %s91, %s93
      %p100 = scmp.eq.s32.totalorder %s20, 2
      %p101 = por %p99, %p100
      %p102 = scmp.ne.s32.totalorder %s93, %s94
      %p103 = scmp.eq.s32.totalorder %s20, 0
      %p104 = por %p102, %p103
      %p105 = scmp.ne.s32.totalorder %s93, %s94
      %p106 = scmp.eq.s32.totalorder %s21, 2
      %p107 = por %p105, %p106
      %p109 = scmp.ne.s32.totalorder %s94, %s108
      %p110 = scmp.eq.s32.totalorder %s21, 0
      %p111 = por %p109, %p110
      %s113 = sadd.s32 %s112, 1
      %p116 = scmp.eq.s32.totalorder %s15, 2
      %p117 = scmp.ne.s32.totalorder %s112, %s114
      %p118 = scmp.eq.s32.totalorder %s15, 0
      %p119 = por %p117, %p118
      %p120 = scmp.ne.s32.totalorder %s112, %s114
      %p121 = scmp.eq.s32.totalorder %s20, 2
      %p122 = por %p120, %p121
      %p123 = scmp.ne.s32.totalorder %s114, %s115
      %p124 = scmp.eq.s32.totalorder %s20, 0
      %p125 = por %p123, %p124
      %p126 = scmp.ne.s32.totalorder %s114, %s115
      %p127 = scmp.eq.s32.totalorder %s21, 2
      %p128 = por %p126, %p127
      %p130 = scmp.ne.s32.totalorder %s115, %s129
      %p131 = scmp.eq.s32.totalorder %s21, 0
      %p132 = por %p130, %p131
      %s133 = ssub.s32 %s15, %s22
      %p134 = scmp.eq.s32.totalorder %s133, 0
      %s136 = sadd.s32 %s135, 1
      %s137 = scalar_select %p134, %s135, %s136
      %p140 = pneg %p134
      %p141 = scmp.eq.s32.totalorder %s15, 2
      %p142 = por %p140, %p141
      %p143 = scmp.ne.s32.totalorder %s135, %s138
      %p144 = scmp.eq.s32.totalorder %s15, 0
      %p145 = por %p143, %p144
      %p146 = scmp.ne.s32.totalorder %s135, %s138
      %p147 = scmp.eq.s32.totalorder %s20, 2
      %p148 = por %p146, %p147
      %p149 = scmp.ne.s32.totalorder %s138, %s139
      %p150 = scmp.eq.s32.totalorder %s20, 0
      %p151 = por %p149, %p150
      %p152 = scmp.ne.s32.totalorder %s138, %s139
      %p153 = scmp.eq.s32.totalorder %s21, 2
      %p154 = por %p152, %p153
      %p156 = scmp.ne.s32.totalorder %s139, %s155
      %p157 = scmp.eq.s32.totalorder %s21, 0
      %p158 = por %p156, %p157
      %p159 = scmp.le.s32.totalorder 1, %s15
      %p160 = scmp.lt.s32.totalorder %s15, 4
      %p161 = pnand %p159, %p160
      %p162 = pneg %p161
      // Predicated region
      $region9: #{tpu_custom_call.1} parent=5 // pred_check
        _
      $region10: #{tpu_custom_call.1} parent=5 // pred_check_branch
        %164 = sbr.rel (%p161) target = $region12
      $region11: #{tpu_custom_call.1} parent=5 // pred_region
        %s165 = ssub.s32 %s15, 1
        // Predicated region
        $region13: #{tpu_custom_call.1} parent=11 // pred_check
          %p166 = pneg %p62
        $region14: #{tpu_custom_call.1} parent=11 // pred_check_branch
          %168 = sbr.rel (%p166) target = $region16
        $region15: #{tpu_custom_call.1} parent=11 // pred_region
          _
        $region16: #{tpu_custom_call.1} parent=11 // pred_fallthru
          _
        // Predicated region
        $region17: #{tpu_custom_call.1} parent=11 // pred_check
          %p169 = pneg %p83
        $region18: #{tpu_custom_call.1} parent=11 // pred_check_branch
          %171 = sbr.rel (%p169) target = $region20
        $region19: #{tpu_custom_call.1} parent=11 // pred_region
          _
        $region20: #{tpu_custom_call.1} parent=11 // pred_fallthru
          _
        // Predicated region
        $region21: #{tpu_custom_call.1} parent=11 // pred_check
          %p172 = pneg %p104
        $region22: #{tpu_custom_call.1} parent=11 // pred_check_branch
          %174 = sbr.rel (%p172) target = $region24
        $region23: #{tpu_custom_call.1} parent=11 // pred_region
          _
        $region24: #{tpu_custom_call.1} parent=11 // pred_fallthru
          _
        // Predicated region
        $region25: #{tpu_custom_call.1} parent=11 // pred_check
          %p175 = pneg %p125
        $region26: #{tpu_custom_call.1} parent=11 // pred_check_branch
          %177 = sbr.rel (%p175) target = $region28
        $region27: #{tpu_custom_call.1} parent=11 // pred_region
          _
        $region28: #{tpu_custom_call.1} parent=11 // pred_fallthru
          _
      $region12: #{tpu_custom_call.1} parent=5 // pred_fallthru
        _
      %p178 = scmp.lt.s32.totalorder %s15, 3
      // Predicated region
      $region29: #{tpu_custom_call.1} parent=5 // pred_check
        %p179 = pneg %p178
      $region30: #{tpu_custom_call.1} parent=5 // pred_check_branch
        %181 = sbr.rel (%p179) target = $region32
      $region31: #{tpu_custom_call.1} parent=5 // pred_region
        // Predicated region
        $region33: #{tpu_custom_call.1} parent=31 // pred_check
          %p182 = pneg %p35
        $region34: #{tpu_custom_call.1} parent=31 // pred_check_branch
          %184 = sbr.rel (%p182) target = $region36
        $region35: #{tpu_custom_call.1} parent=31 // pred_region
          %s185 = smul.u32 16, %s15
          %p186 = scmp.lt.s32.totalorder %s185, 47
          %s187 = scalar_select %p186, %s185, 47
          %s188 = smul.addr %s187, 8
          %s189 = scalar_lea.vmem %s0, %s188
          %s190 = smul.u32 16, %s15
        $region36: #{tpu_custom_call.1} parent=31 // pred_fallthru
          _
      $region32: #{tpu_custom_call.1} parent=5 // pred_fallthru
        _
      %p191 = scmp.le.s32.totalorder 1, %s15
      %p192 = scmp.lt.s32.totalorder %s15, 4
      %p193 = pnand %p191, %p192
      %p194 = pneg %p193
      // Predicated region
      $region37: #{tpu_custom_call.1} parent=5 // pred_check
        _
      $region38: #{tpu_custom_call.1} parent=5 // pred_check_branch
        %196 = sbr.rel (%p193) target = $region40
      $region39: #{tpu_custom_call.1} parent=5 // pred_region
        %s197 = ssub.s32 %s15, 1
        %s198 = smul.u32 16, %s20
        %p199 = scmp.lt.s32.totalorder %s198, 47
        %s200 = scalar_select %p199, %s198, 47
        %s201 = smul.addr %s200, 8
        %s202 = scalar_lea.vmem %s0, %s201
        %p203 = pneg %p41
        %p204 = pneg %p38
        %p205 = pneg %p62
        %p206 = pneg %p59
        %p207 = pneg %p83
        %p208 = pneg %p80
        %p209 = pneg %p104
        %p210 = pneg %p101
        %p211 = pneg %p125
        %p212 = pneg %p122
        %p213 = pneg %p151
        %p214 = pneg %p148
        %s215 = sand.u32 %s138, 1
        %s216 = scalar_lea.sflag [#allocation4], %s215
        %s217 = sand.u32 %s138, 1
        %s218 = scalar_lea.vmem [#allocation3], %s217
        %s219 = smul.u32 16, %s20
        %p220 = scmp.lt.s32.totalorder %s219, 47
        %s221 = scalar_select %p220, %s219, 47
        %s222 = smul.addr %s221, 8
        %s223 = scalar_lea.vmem %s0, %s222
        %s224 = smul.u32 16, %s20
        %v225 = vld [vmem:[%s223] sm:$0xff]
        %v226 = vld [vmem:[%s223 + $0x8] sm:$0xff]
        %v227 = vld [vmem:[%s223 + $0x10] sm:$0xff]
        %v228 = vld [vmem:[%s223 + $0x18] sm:$0xff]
        %v229 = vld [vmem:[%s223 + $0x20] sm:$0xff]
        %v230 = vld [vmem:[%s223 + $0x28] sm:$0xff]
        %v231 = vld [vmem:[%s223 + $0x30] sm:$0xff]
        %v232 = vld [vmem:[%s223 + $0x38] sm:$0xff]
        %v233 = vld [vmem:[%s223 + $0x40] sm:$0xff]
        %v234 = vld [vmem:[%s223 + $0x48] sm:$0xff]
        %v235 = vld [vmem:[%s223 + $0x50] sm:$0xff]
        %v236 = vld [vmem:[%s223 + $0x58] sm:$0xff]
        %v237 = vld [vmem:[%s223 + $0x60] sm:$0xff]
        %v238 = vld [vmem:[%s223 + $0x68] sm:$0xff]
        %v239 = vld [vmem:[%s223 + $0x70] sm:$0xff]
        %v240 = vld [vmem:[%s223 + $0x78] sm:$0xff]
        %v241 = vld [vmem:[%s1] sm:$0xff]
        %v242 = vld [vmem:[%s1 + $0x8] sm:$0xff]
        %v243 = vld [vmem:[%s1 + $0x10] sm:$0xff]
        %v244 = vld [vmem:[%s1 + $0x18] sm:$0xff]
        %v245 = vld [vmem:[%s1 + $0x20] sm:$0xff]
        %v246 = vld [vmem:[%s1 + $0x28] sm:$0xff]
        %v247 = vld [vmem:[%s1 + $0x30] sm:$0xff]
        %v248 = vld [vmem:[%s1 + $0x38] sm:$0xff]
        %v249 = vld [vmem:[%s1 + $0x40] sm:$0xff]
        %v250 = vld [vmem:[%s1 + $0x48] sm:$0xff]
        %v251 = vld [vmem:[%s1 + $0x50] sm:$0xff]
        %v252 = vld [vmem:[%s1 + $0x58] sm:$0xff]
        %v253 = vld [vmem:[%s2] sm:$0x1]
        %v255 = vlaneseq
        %v256 = vshrl.u32 %v255, 7
        %v257 = vsub.s32 0, %v256
        %v258 = vrot.slane %v253, %v257
        %vm260 = vcmask 785408
        %v262 = vsel %vm260, %v225, 0
        %v265 = vsel %vm260, %v226, 0
        %v268 = vsel %vm260, %v227, 0
        %v271 = vsel %vm260, %v228, 0
        %v274 = vsel %vm260, %v229, 0
        %v277 = vsel %vm260, %v230, 0
        %v280 = vsel %vm260, %v231, 0
        %v283 = vsel %vm260, %v232, 0
        %v286 = vsel %vm260, %v233, 0
        %v289 = vsel %vm260, %v234, 0
        %v292 = vsel %vm260, %v235, 0
        %v295 = vsel %vm260, %v236, 0
        %v298 = vsel %vm260, %v237, 0
        %v301 = vsel %vm260, %v238, 0
        %v304 = vsel %vm260, %v239, 0
        %v307 = vsel %vm260, %v240, 0
        %309 = vmatprep.subr.mxu0 0.0
        %310 = vmatpush1.msra.mxu0 %v241
        %311 = vmatprep.subr.mxu0 0.0
        %312 = vmatpush1.msra.mxu0 %v242
        %313 = vmatprep.subr.mxu0 0.0
        %314 = vmatpush1.msra.mxu0 %v243
        %315 = vmatprep.subr.mxu0 0.0
        %316 = vmatpush1.msra.mxu0 %v244
        %317 = vmatprep.subr.mxu0 0.0
        %318 = vmatpush1.msra.mxu0 %v245
        %319 = vmatprep.subr.mxu0 0.0
        %320 = vmatpush1.msra.mxu0 %v246
        %321 = vmatprep.subr.mxu0 0.0
        %322 = vmatpush1.msra.mxu0 %v247
        %323 = vmatprep.subr.mxu0 0.0
        %324 = vmatpush1.msra.mxu0 %v248
        %325 = vmatprep.subr.mxu0 0.0
        %326 = vmatpush1.msra.mxu0 %v249
        %327 = vmatprep.subr.mxu0 0.0
        %328 = vmatpush1.msra.mxu0 %v250
        %329 = vmatprep.subr.mxu0 0.0
        %330 = vmatpush1.msra.mxu0 %v251
        %331 = vmatprep.subr.mxu0 0.0
        %332 = vmatpush1.msra.mxu0 %v252
        %333 = vmatprep.subr.mxu0 0.0
        %334 = vmatpush1.msra.mxu0 0.0
        %335 = vmatprep.subr.mxu0 0.0
        %336 = vmatpush1.msra.mxu0 0.0
        %337 = vmatprep.subr.mxu0 0.0
        %338 = vmatpush1.msra.mxu0 0.0
        %339 = vmatprep.subr.mxu0 0.0
        %340 = vmatpush1.msra.mxu0 0.0
        %341 = vmatprep.subr.mxu0 0.0
        %342 = vmatpush1.msra.mxu0 0.0
        %343 = vmatprep.subr.mxu0 0.0
        %344 = vmatpush1.msra.mxu0 0.0
        %345 = vmatprep.subr.mxu0 0.0
        %346 = vmatpush1.msra.mxu0 0.0
        %347 = vmatprep.subr.mxu0 0.0
        %348 = vmatpush1.msra.mxu0 0.0
        %349 = vmatprep.subr.mxu0 0.0
        %350 = vmatpush1.msra.mxu0 0.0
        %351 = vmatprep.subr.mxu0 0.0
        %352 = vmatpush1.msra.mxu0 0.0
        %353 = vmatprep.subr.mxu0 0.0
        %354 = vmatpush1.msra.mxu0 0.0
        %355 = vmatprep.subr.mxu0 0.0
        %356 = vmatpush1.msra.mxu0 0.0
        %357 = vmatprep.subr.mxu0 0.0
        %358 = vmatpush1.msra.mxu0 0.0
        %359 = vmatprep.subr.mxu0 0.0
        %360 = vmatpush1.msra.mxu0 0.0
        %361 = vmatprep.subr.mxu0 0.0
        %362 = vmatpush1.msra.mxu0 0.0
        %363 = vmatprep.subr.mxu0 0.0
        %364 = vmatpush1.msra.mxu0 0.0
        %365 = vmatprep.subr.mxu0 0.0
        %366 = vmatpush1.msra.mxu0 0.0
        %367 = vmatprep.subr.mxu0 0.0
        %368 = vmatpush1.msra.mxu0 0.0
        %369 = vmatprep.subr.mxu0 0.0
        %370 = vmatpush1.msra.mxu0 0.0
        %371 = vmatprep.subr.mxu0 0.0
        %372 = vmatpush1.msra.mxu0 0.0
        %373 = vmatprep.mubr.f32.mxu0 0.0
        %374 = vmatmul.mubr.f32.gmra.mrb[0].mxu0 %v262
        %v375 = vpop.f32.mrb[0].mxu0
        %v376 = vadd.f32 %v258, %v375
        %v377 = vpop.f32.mrb[0].mxu0
        %378 = vmatprep.mubr.f32.mxu0 0.0
        %379 = vmatmul.mubr.f32.gmra.mrb[0].mxu0 %v265
        %v380 = vpop.f32.mrb[0].mxu0
        %v381 = vadd.f32 %v258, %v380
        %v382 = vpop.f32.mrb[0].mxu0
        %383 = vmatprep.mubr.f32.mxu0 0.0
        %384 = vmatmul.mubr.f32.gmra.mrb[0].mxu0 %v268
        %v385 = vpop.f32.mrb[0].mxu0
        %v386 = vadd.f32 %v258, %v385
        %v387 = vpop.f32.mrb[0].mxu0
        %388 = vmatprep.mubr.f32.mxu0 0.0
        %389 = vmatmul.mubr.f32.gmra.mrb[0].mxu0 %v271
        %v390 = vpop.f32.mrb[0].mxu0
        %v391 = vadd.f32 %v258, %v390
        %v392 = vpop.f32.mrb[0].mxu0
        %393 = vmatprep.mubr.f32.mxu0 0.0
        %394 = vmatmul.mubr.f32.gmra.mrb[0].mxu0 %v274
        %v395 = vpop.f32.mrb[0].mxu0
        %v396 = vadd.f32 %v258, %v395
        %v397 = vpop.f32.mrb[0].mxu0
        %398 = vmatprep.mubr.f32.mxu0 0.0
        %399 = vmatmul.mubr.f32.gmra.mrb[0].mxu0 %v277
        %v400 = vpop.f32.mrb[0].mxu0
        %v401 = vadd.f32 %v258, %v400
        %v402 = vpop.f32.mrb[0].mxu0
        %403 = vmatprep.mubr.f32.mxu0 0.0
        %404 = vmatmul.mubr.f32.gmra.mrb[0].mxu0 %v280
        %v405 = vpop.f32.mrb[0].mxu0
        %v406 = vadd.f32 %v258, %v405
        %v407 = vpop.f32.mrb[0].mxu0
        %408 = vmatprep.mubr.f32.mxu0 0.0
        %409 = vmatmul.mubr.f32.gmra.mrb[0].mxu0 %v283
        %v410 = vpop.f32.mrb[0].mxu0
        %v411 = vadd.f32 %v258, %v410
        %v412 = vpop.f32.mrb[0].mxu0
        %413 = vmatprep.mubr.f32.mxu0 0.0
        %414 = vmatmul.mubr.f32.gmra.mrb[0].mxu0 %v286
        %v415 = vpop.f32.mrb[0].mxu0
        %v416 = vadd.f32 %v258, %v415
        %v417 = vpop.f32.mrb[0].mxu0
        %418 = vmatprep.mubr.f32.mxu0 0.0
        %419 = vmatmul.mubr.f32.gmra.mrb[0].mxu0 %v289
        %v420 = vpop.f32.mrb[0].mxu0
        %v421 = vadd.f32 %v258, %v420
        %v422 = vpop.f32.mrb[0].mxu0
        %423 = vmatprep.mubr.f32.mxu0 0.0
        %424 = vmatmul.mubr.f32.gmra.mrb[0].mxu0 %v292
        %v425 = vpop.f32.mrb[0].mxu0
        %v426 = vadd.f32 %v258, %v425
        %v427 = vpop.f32.mrb[0].mxu0
        %428 = vmatprep.mubr.f32.mxu0 0.0
        %429 = vmatmul.mubr.f32.gmra.mrb[0].mxu0 %v295
        %v430 = vpop.f32.mrb[0].mxu0
        %v431 = vadd.f32 %v258, %v430
        %v432 = vpop.f32.mrb[0].mxu0
        %433 = vmatprep.mubr.f32.mxu0 0.0
        %434 = vmatmul.mubr.f32.gmra.mrb[0].mxu0 %v298
        %v435 = vpop.f32.mrb[0].mxu0
        %v436 = vadd.f32 %v258, %v435
        %v437 = vpop.f32.mrb[0].mxu0
        %438 = vmatprep.mubr.f32.mxu0 0.0
        %439 = vmatmul.mubr.f32.gmra.mrb[0].mxu0 %v301
        %v440 = vpop.f32.mrb[0].mxu0
        %v441 = vadd.f32 %v258, %v440
        %v442 = vpop.f32.mrb[0].mxu0
        %443 = vmatprep.mubr.f32.mxu0 0.0
        %444 = vmatmul.mubr.f32.gmra.mrb[0].mxu0 %v304
        %v445 = vpop.f32.mrb[0].mxu0
        %v446 = vadd.f32 %v258, %v445
        %v447 = vpop.f32.mrb[0].mxu0
        %448 = vmatprep.mubr.f32.mxu0 0.0
        %449 = vmatmul.mubr.f32.gmra.mrb[0].mxu0 %v307
        %v450 = vpop.f32.mrb[0].mxu0
        %v451 = vadd.f32 %v258, %v450
        %v452 = vpop.f32.mrb[0].mxu0
        %453 = vdwg.mxu0
        %v454 = vmax.f32 %v376, 0.0
        %v455 = vmax.f32 %v381, 0.0
        %v456 = vmax.f32 %v386, 0.0
        %v457 = vmax.f32 %v391, 0.0
        %v458 = vmax.f32 %v396, 0.0
        %v459 = vmax.f32 %v401, 0.0
        %v460 = vmax.f32 %v406, 0.0
        %v461 = vmax.f32 %v411, 0.0
        %v462 = vmax.f32 %v416, 0.0
        %v463 = vmax.f32 %v421, 0.0
        %v464 = vmax.f32 %v426, 0.0
        %v465 = vmax.f32 %v431, 0.0
        %v466 = vmax.f32 %v436, 0.0
        %v467 = vmax.f32 %v441, 0.0
        %v468 = vmax.f32 %v446, 0.0
        %v469 = vmax.f32 %v451, 0.0
        %v470 = vld [vmem:[%s3] sm:$0x1]
        %v472 = vlaneseq
        %v473 = vshrl.u32 %v472, 7
        %v474 = vsub.s32 0, %v473
        %v475 = vrot.slane %v470, %v474
        %v477 = vmul.f32 %v454, %v475
        %v478 = vmul.f32 %v455, %v475
        %v479 = vmul.f32 %v456, %v475
        %v480 = vmul.f32 %v457, %v475
        %v481 = vmul.f32 %v458, %v475
        %v482 = vmul.f32 %v459, %v475
        %v483 = vmul.f32 %v460, %v475
        %v484 = vmul.f32 %v461, %v475
        %v485 = vmul.f32 %v462, %v475
        %v486 = vmul.f32 %v463, %v475
        %v487 = vmul.f32 %v464, %v475
        %v488 = vmul.f32 %v465, %v475
        %v489 = vmul.f32 %v466, %v475
        %v490 = vmul.f32 %v467, %v475
        %v491 = vmul.f32 %v468, %v475
        %v492 = vmul.f32 %v469, %v475
        %493 = vadd.xlane.f32.xlu0 %v477
        %v494 = vpop.xlane.xlu0 %493
        %495 = vadd.xlane.f32.xlu0 %v478
        %v496 = vpop.xlane.xlu0 %495
        %497 = vadd.xlane.f32.xlu0 %v479
        %v498 = vpop.xlane.xlu0 %497
        %499 = vadd.xlane.f32.xlu0 %v480
        %v500 = vpop.xlane.xlu0 %499
        %501 = vadd.xlane.f32.xlu0 %v481
        %v502 = vpop.xlane.xlu0 %501
        %503 = vadd.xlane.f32.xlu0 %v482
        %v504 = vpop.xlane.xlu0 %503
        %505 = vadd.xlane.f32.xlu0 %v483
        %v506 = vpop.xlane.xlu0 %505
        %507 = vadd.xlane.f32.xlu0 %v484
        %v508 = vpop.xlane.xlu0 %507
        %509 = vadd.xlane.f32.xlu0 %v485
        %v510 = vpop.xlane.xlu0 %509
        %511 = vadd.xlane.f32.xlu0 %v486
        %v512 = vpop.xlane.xlu0 %511
        %513 = vadd.xlane.f32.xlu0 %v487
        %v514 = vpop.xlane.xlu0 %513
        %515 = vadd.xlane.f32.xlu0 %v488
        %v516 = vpop.xlane.xlu0 %515
        %517 = vadd.xlane.f32.xlu0 %v489
        %v518 = vpop.xlane.xlu0 %517
        %519 = vadd.xlane.f32.xlu0 %v490
        %v520 = vpop.xlane.xlu0 %519
        %521 = vadd.xlane.f32.xlu0 %v491
        %v522 = vpop.xlane.xlu0 %521
        %523 = vadd.xlane.f32.xlu0 %v492
        %v524 = vpop.xlane.xlu0 %523
        %s525 = sld [smem:[#allocation2]]
        %v526 = vstv %s525
        %v527 = vadd.f32 %v494, %v526
        %v528 = vadd.f32 %v496, %v526
        %v529 = vadd.f32 %v498, %v526
        %v530 = vadd.f32 %v500, %v526
        %v531 = vadd.f32 %v502, %v526
        %v532 = vadd.f32 %v504, %v526
        %v533 = vadd.f32 %v506, %v526
        %v534 = vadd.f32 %v508, %v526
        %v535 = vadd.f32 %v510, %v526
        %v536 = vadd.f32 %v512, %v526
        %v537 = vadd.f32 %v514, %v526
        %v538 = vadd.f32 %v516, %v526
        %v539 = vadd.f32 %v518, %v526
        %v540 = vadd.f32 %v520, %v526
        %v541 = vadd.f32 %v522, %v526
        %v542 = vadd.f32 %v524, %v526
        %v543 = vxor.u32 %v527, 2147483648
        %v544 = vxor.u32 %v528, 2147483648
        %v545 = vxor.u32 %v529, 2147483648
        %v546 = vxor.u32 %v530, 2147483648
        %v547 = vxor.u32 %v531, 2147483648
        %v548 = vxor.u32 %v532, 2147483648
        %v549 = vxor.u32 %v533, 2147483648
        %v550 = vxor.u32 %v534, 2147483648
        %v551 = vxor.u32 %v535, 2147483648
        %v552 = vxor.u32 %v536, 2147483648
        %v553 = vxor.u32 %v537, 2147483648
        %v554 = vxor.u32 %v538, 2147483648
        %v555 = vxor.u32 %v539, 2147483648
        %v556 = vxor.u32 %v540, 2147483648
        %v557 = vxor.u32 %v541, 2147483648
        %v558 = vxor.u32 %v542, 2147483648
        %v559 = vmul.f32 %v543, 1.442695
        %v560 = vpow.pop %v559
        %v561 = vmul.f32 %v544, 1.442695
        %v562 = vpow.pop %v561
        %v563 = vmul.f32 %v545, 1.442695
        %v564 = vpow.pop %v563
        %v565 = vmul.f32 %v546, 1.442695
        %v566 = vpow.pop %v565
        %v567 = vmul.f32 %v547, 1.442695
        %v568 = vpow.pop %v567
        %v569 = vmul.f32 %v548, 1.442695
        %v570 = vpow.pop %v569
        %v571 = vmul.f32 %v549, 1.442695
        %v572 = vpow.pop %v571
        %v573 = vmul.f32 %v550, 1.442695
        %v574 = vpow.pop %v573
        %v575 = vmul.f32 %v551, 1.442695
        %v576 = vpow.pop %v575
        %v577 = vmul.f32 %v552, 1.442695
        %v578 = vpow.pop %v577
        %v579 = vmul.f32 %v553, 1.442695
        %v580 = vpow.pop %v579
        %v581 = vmul.f32 %v554, 1.442695
        %v582 = vpow.pop %v581
        %v583 = vmul.f32 %v555, 1.442695
        %v584 = vpow.pop %v583
        %v585 = vmul.f32 %v556, 1.442695
        %v586 = vpow.pop %v585
        %v587 = vmul.f32 %v557, 1.442695
        %v588 = vpow.pop %v587
        %v589 = vmul.f32 %v558, 1.442695
        %v590 = vpow.pop %v589
        %v591 = vadd.f32 %v560, 1.0
        %v592 = vadd.f32 %v562, 1.0
        %v593 = vadd.f32 %v564, 1.0
        %v594 = vadd.f32 %v566, 1.0
        %v595 = vadd.f32 %v568, 1.0
        %v596 = vadd.f32 %v570, 1.0
        %v597 = vadd.f32 %v572, 1.0
        %v598 = vadd.f32 %v574, 1.0
        %v599 = vadd.f32 %v576, 1.0
        %v600 = vadd.f32 %v578, 1.0
        %v601 = vadd.f32 %v580, 1.0
        %v602 = vadd.f32 %v582, 1.0
        %v603 = vadd.f32 %v584, 1.0
        %v604 = vadd.f32 %v586, 1.0
        %v605 = vadd.f32 %v588, 1.0
        %v606 = vadd.f32 %v590, 1.0
        %v607 = vrcp.pop %v591
        %v608 = vmul.f32 1.0, %v607
        %v609 = vrcp.pop %v592
        %v610 = vmul.f32 1.0, %v609
        %v611 = vrcp.pop %v593
        %v612 = vmul.f32 1.0, %v611
        %v613 = vrcp.pop %v594
        %v614 = vmul.f32 1.0, %v613
        %v615 = vrcp.pop %v595
        %v616 = vmul.f32 1.0, %v615
        %v617 = vrcp.pop %v596
        %v618 = vmul.f32 1.0, %v617
        %v619 = vrcp.pop %v597
        %v620 = vmul.f32 1.0, %v619
        %v621 = vrcp.pop %v598
        %v622 = vmul.f32 1.0, %v621
        %v623 = vrcp.pop %v599
        %v624 = vmul.f32 1.0, %v623
        %v625 = vrcp.pop %v600
        %v626 = vmul.f32 1.0, %v625
        %v627 = vrcp.pop %v601
        %v628 = vmul.f32 1.0, %v627
        %v629 = vrcp.pop %v602
        %v630 = vmul.f32 1.0, %v629
        %v631 = vrcp.pop %v603
        %v632 = vmul.f32 1.0, %v631
        %v633 = vrcp.pop %v604
        %v634 = vmul.f32 1.0, %v633
        %v635 = vrcp.pop %v605
        %v636 = vmul.f32 1.0, %v635
        %v637 = vrcp.pop %v606
        %v638 = vmul.f32 1.0, %v637
        %v655 = vlaneseq
        %v656 = vand.u32 %v655, 127
        %v657 = vlaneseq
        %v658 = vshrl.u32 %v657, 7
        %v659 = vsub.s32 %v656, %v658
        %v660 = vrot.slane %v608, %v659
        %v661 = vadd.s32 %v656, 4294967288
        %v662 = vlaneseq
        %v663 = vshrl.u32 %v662, 7
        %v664 = vsub.s32 %v661, %v663
        %v665 = vrot.slane %v610, %v664
        %vm666 = vcmask 130112
        %v667 = vsel %vm666, %v665, %v660
        %v668 = vadd.s32 %v656, 4294967280
        %v669 = vlaneseq
        %v670 = vshrl.u32 %v669, 7
        %v671 = vsub.s32 %v668, %v670
        %v672 = vrot.slane %v612, %v671
        %vm673 = vcmask 195712
        %v674 = vsel %vm673, %v672, %v667
        %v675 = vadd.s32 %v656, 4294967272
        %v676 = vlaneseq
        %v677 = vshrl.u32 %v676, 7
        %v678 = vsub.s32 %v675, %v677
        %v679 = vrot.slane %v614, %v678
        %vm680 = vcmask 261312
        %v681 = vsel %vm680, %v679, %v674
        %v682 = vadd.s32 %v656, 4294967264
        %v683 = vlaneseq
        %v684 = vshrl.u32 %v683, 7
        %v685 = vsub.s32 %v682, %v684
        %v686 = vrot.slane %v616, %v685
        %vm687 = vcmask 326912
        %v688 = vsel %vm687, %v686, %v681
        %v689 = vadd.s32 %v656, 4294967256
        %v690 = vlaneseq
        %v691 = vshrl.u32 %v690, 7
        %v692 = vsub.s32 %v689, %v691
        %v693 = vrot.slane %v618, %v692
        %vm694 = vcmask 392512
        %v695 = vsel %vm694, %v693, %v688
        %v696 = vadd.s32 %v656, 4294967248
        %v697 = vlaneseq
        %v698 = vshrl.u32 %v697, 7
        %v699 = vsub.s32 %v696, %v698
        %v700 = vrot.slane %v620, %v699
        %vm701 = vcmask 458112
        %v702 = vsel %vm701, %v700, %v695
        %v703 = vadd.s32 %v656, 4294967240
        %v704 = vlaneseq
        %v705 = vshrl.u32 %v704, 7
        %v706 = vsub.s32 %v703, %v705
        %v707 = vrot.slane %v622, %v706
        %vm708 = vcmask 523712
        %v709 = vsel %vm708, %v707, %v702
        %v710 = vadd.s32 %v656, 4294967232
        %v711 = vlaneseq
        %v712 = vshrl.u32 %v711, 7
        %v713 = vsub.s32 %v710, %v712
        %v714 = vrot.slane %v624, %v713
        %vm715 = vcmask 589312
        %v716 = vsel %vm715, %v714, %v709
        %v717 = vadd.s32 %v656, 4294967224
        %v718 = vlaneseq
        %v719 = vshrl.u32 %v718, 7
        %v720 = vsub.s32 %v717, %v719
        %v721 = vrot.slane %v626, %v720
        %vm722 = vcmask 654912
        %v723 = vsel %vm722, %v721, %v716
        %v724 = vadd.s32 %v656, 4294967216
        %v725 = vlaneseq
        %v726 = vshrl.u32 %v725, 7
        %v727 = vsub.s32 %v724, %v726
        %v728 = vrot.slane %v628, %v727
        %vm729 = vcmask 720512
        %v730 = vsel %vm729, %v728, %v723
        %v731 = vadd.s32 %v656, 4294967208
        %v732 = vlaneseq
        %v733 = vshrl.u32 %v732, 7
        %v734 = vsub.s32 %v731, %v733
        %v735 = vrot.slane %v630, %v734
        %vm736 = vcmask 786112
        %v737 = vsel %vm736, %v735, %v730
        %v738 = vadd.s32 %v656, 4294967200
        %v739 = vlaneseq
        %v740 = vshrl.u32 %v739, 7
        %v741 = vsub.s32 %v738, %v740
        %v742 = vrot.slane %v632, %v741
        %vm743 = vcmask 851712
        %v744 = vsel %vm743, %v742, %v737
        %v745 = vadd.s32 %v656, 4294967192
        %v746 = vlaneseq
        %v747 = vshrl.u32 %v746, 7
        %v748 = vsub.s32 %v745, %v747
        %v749 = vrot.slane %v634, %v748
        %vm750 = vcmask 917312
        %v751 = vsel %vm750, %v749, %v744
        %v752 = vadd.s32 %v656, 4294967184
        %v753 = vlaneseq
        %v754 = vshrl.u32 %v753, 7
        %v755 = vsub.s32 %v752, %v754
        %v756 = vrot.slane %v636, %v755
        %vm757 = vcmask 982912
        %v758 = vsel %vm757, %v756, %v751
        %v759 = vadd.s32 %v656, 4294967176
        %v760 = vlaneseq
        %v761 = vshrl.u32 %v760, 7
        %v762 = vsub.s32 %v759, %v761
        %v763 = vrot.slane %v638, %v762
        %vm764 = vcmask 1048512
        %v765 = vsel %vm764, %v763, %v758
        %767 = vst [vmem:[%s218] sm:$0x1] %v765
        %s768 = sand.u32 %s138, 1
        %s769 = scalar_lea.sflag [#allocation4], %s768
        %s770 = sand.u32 %s138, 1
        %s771 = scalar_lea.vmem [#allocation3], %s770
        // Predicated region
        $region41: #{tpu_custom_call.1} parent=39 // pred_check
          %p772 = pneg %p148
        $region42: #{tpu_custom_call.1} parent=39 // pred_check_branch
          %774 = sbr.rel (%p772) target = $region44
        $region43: #{tpu_custom_call.1} parent=39 // pred_region
          %s776 = ssub.s32 16, 16
          %777 = vsyncadd %s769, %s776
          %s778 = smul.addr %s20, 16
          %s779 = scalar_lea.hbm %s5, %s778
          %s781 = sshll.u32 %s771, 4
          %s782 = int_to_ptr.vmem [resolvable:$true] %s781
          %784 = dma.vmem_to_hbm [thread:$0]  %s782, 16, %s779, %s769
        $region44: #{tpu_custom_call.1} parent=39 // pred_fallthru
          _
      $region40: #{tpu_custom_call.1} parent=5 // pred_fallthru
        _
      %p785 = scmp.le.s32.totalorder 2, %s15
      // Predicated region
      $region45: #{tpu_custom_call.1} parent=5 // pred_check
        %p786 = pneg %p785
      $region46: #{tpu_custom_call.1} parent=5 // pred_check_branch
        %788 = sbr.rel (%p786) target = $region48
      $region47: #{tpu_custom_call.1} parent=5 // pred_region
        %s789 = ssub.s32 %s15, 2
        // Predicated region
        $region49: #{tpu_custom_call.1} parent=47 // pred_check
          %p790 = pneg %p154
        $region50: #{tpu_custom_call.1} parent=47 // pred_check_branch
          %792 = sbr.rel (%p790) target = $region52
        $region51: #{tpu_custom_call.1} parent=47 // pred_region
          %s793 = sand.u32 %s139, 1
          %s794 = scalar_lea.sflag [#allocation4], %s793
          %s795 = sand.u32 %s139, 1
          %s796 = scalar_lea.vmem [#allocation3], %s795
          %797 = dma.done %s794, 16
        $region52: #{tpu_custom_call.1} parent=47 // pred_fallthru
          _
      $region48: #{tpu_custom_call.1} parent=5 // pred_fallthru
        _
    $region6: #{tpu_custom_call.1} parent=1 // loop_footer
      %s19 = sadd.s32 1, %s15
    $region7: #{tpu_custom_call.1} parent=1 // loop_footer_branch
      %14 = sbr.rel target = $region3
    $region8: #{tpu_custom_call.1} parent=1 // loop_exit
      _
    %798 = vsyncpa [#allocation4], 1
    %s799 = scalar_lea.sflag [#allocation4], 1
    %800 = vsyncpa %s799, 1

</llo_original>
